<compile_context>
chip_gen: v7x
topology: tpu7x:2x2x1
jax: 0.10.0
libtpu: 0.0.40
codegen_flags: <defaults>
</compile_context>

<pallas_src>
import jax
import jax.numpy as jnp
from jax import lax
from jax.experimental import pallas as pl
from jax.experimental.pallas import tpu as pltpu
import numpy as np

FEATURE_DIM = 768
EMBED_DIM = 256
HIDDEN1 = 32
HIDDEN2 = HIDDEN1 // 2   # 16
OUT_PAD = 128            # lane-dense padded width of the final Linear output


def nnue_kernel(idx_ref, start_ref, end_ref,                       # int32 VMEM inputs
                emb_ref, w1_ref, b1_ref, w2_ref, b2_ref, w3_ref, b3_ref,
                out_ref):
    T = idx_ref.shape[0]          # padded total number of index slots
    BB = out_ref.shape[0]         # batch block
    F = emb_ref.shape[0]          # FEATURE_DIM

    # --- EmbeddingBag(mode='sum') as two MXU matmuls -------------------------
    # One-hot over features for every index slot: O[j, f] = (idx[j] == f).
    feat_iota = lax.broadcasted_iota(jnp.int32, (T, F), 1)
    onehot = jnp.where(feat_iota == idx_ref[...], 1.0, 0.0).astype(jnp.bfloat16)

    # Segment membership: S[b, j] = (start[b] <= j < end[b]).  Padded index
    # slots (j >= total) and padded batch rows (start == end == 0) vanish here.
    slot_iota = lax.broadcasted_iota(jnp.int32, (BB, T), 1)
    seg = jnp.where((slot_iota >= start_ref[...]) & (slot_iota < end_ref[...]),
                    1.0, 0.0).astype(jnp.bfloat16)

    # multihot[b, f] = number of occurrences of feature f in bag b (exact ints).
    multihot = jnp.dot(seg, onehot, preferred_element_type=jnp.float32)
    bag = jnp.dot(multihot.astype(jnp.bfloat16), emb_ref[...],
                  preferred_element_type=jnp.float32)              # (BB, EMBED_DIM)

    # --- MLP head (dropout = identity in eval mode) ---------------------------
    h1 = jnp.dot(bag.astype(jnp.bfloat16), w1_ref[...],
                 preferred_element_type=jnp.float32) + b1_ref[...]
    h1 = jnp.maximum(h1, 0.0)                                      # ReLU
    h2 = jnp.dot(h1.astype(jnp.bfloat16), w2_ref[...],
                 preferred_element_type=jnp.float32) + b2_ref[...]
    h2 = jnp.maximum(h2, 0.0)                                      # ReLU
    # Final Linear padded to OUT_PAD lanes -> unmasked lane-dense store.
    out_ref[...] = jnp.dot(h2.astype(jnp.bfloat16), w3_ref[...],
                           preferred_element_type=jnp.float32) + b3_ref[...]


def prepare_kernel_params(params):
    """Cast weights to bf16 and pad the output layer to OUT_PAD lanes."""
    emb, w1, b1, w2, b2, w3, b3 = params
    embq = emb.astype(jnp.bfloat16)
    w1q = w1.astype(jnp.bfloat16)
    w2q = w2.astype(jnp.bfloat16)
    w3p = jnp.zeros((HIDDEN2, OUT_PAD), jnp.bfloat16).at[:, :1].set(w3.astype(jnp.bfloat16))
    b3p = jnp.zeros((1, OUT_PAD), jnp.float32).at[:, :1].set(b3)
    return (embq, w1q, b1, w2q, b2, w3p, b3p)


def nnue_forward(kparams, feature_indices, offsets_ext, *, batch_block=8):
    """feature_indices: int32 [max_total] (padded); offsets_ext: int32 [B+1]."""
    emb, w1, b1, w2, b2, w3p, b3p = kparams
    B = offsets_ext.shape[0] - 1
    BB = batch_block
    B_pad = ((B + BB - 1) // BB) * BB

    # Pad index slots up to a sublane multiple; padded slots fall outside every
    # segment (j >= total) so they never contribute.
    idx = feature_indices.astype(jnp.int32)
    T = idx.shape[0]
    T_pad = ((T + 7) // 8) * 8
    if T_pad != T:
        idx = jnp.concatenate([idx, jnp.zeros((T_pad - T,), jnp.int32)])
    idx2d = idx.reshape(T_pad, 1)

    start = offsets_ext[:-1].astype(jnp.int32)
    end = offsets_ext[1:].astype(jnp.int32)
    if B_pad != B:
        pad = jnp.zeros((B_pad - B,), jnp.int32)
        start = jnp.concatenate([start, pad])
        end = jnp.concatenate([end, pad])
    start2d = start.reshape(B_pad, 1)
    end2d = end.reshape(B_pad, 1)

    num_blocks = B_pad // BB

    out = pl.pallas_call(
        nnue_kernel,
        out_shape=jax.ShapeDtypeStruct((B_pad, OUT_PAD), jnp.float32),
        grid=(num_blocks,),
        in_specs=[
            pl.BlockSpec((T_pad, 1), lambda i: (0, 0)),     # indices (shared)
            pl.BlockSpec((BB, 1), lambda i: (i, 0)),        # per-block bag starts
            pl.BlockSpec((BB, 1), lambda i: (i, 0)),        # per-block bag ends
            pl.BlockSpec(emb.shape, lambda i: (0, 0)),      # embedding table (resident)
            pl.BlockSpec(w1.shape, lambda i: (0, 0)),
            pl.BlockSpec(b1.shape, lambda i: (0, 0)),
            pl.BlockSpec(w2.shape, lambda i: (0, 0)),
            pl.BlockSpec(b2.shape, lambda i: (0, 0)),
            pl.BlockSpec(w3p.shape, lambda i: (0, 0)),
            pl.BlockSpec(b3p.shape, lambda i: (0, 0)),
        ],
        out_specs=pl.BlockSpec((BB, OUT_PAD), lambda i: (i, 0)),
        compiler_params=pltpu.CompilerParams(
            dimension_semantics=("parallel",)),
    )(idx2d, start2d, end2d, emb, w1, b1, w2, b2, w3p, b3p)

    return out[:B, :1]


def init_params(key):
    """Deterministic init mirroring the PyTorch layer shapes (weights stored [in, out])."""
    ks = jax.random.split(key, 7)

    def u(k, shape, fan_in):
        bound = 1.0 / np.sqrt(fan_in)
        return jax.random.uniform(k, shape, jnp.float32, -bound, bound)

    emb = jax.random.normal(ks[0], (FEATURE_DIM, EMBED_DIM), jnp.float32) * 0.05
    w1 = u(ks[1], (EMBED_DIM, HIDDEN1), EMBED_DIM)
    b1 = u(ks[2], (1, HIDDEN1), EMBED_DIM)
    w2 = u(ks[3], (HIDDEN1, HIDDEN2), HIDDEN1)
    b2 = u(ks[4], (1, HIDDEN2), HIDDEN1)
    w3 = u(ks[5], (HIDDEN2, 1), HIDDEN2)
    b3 = u(ks[6], (1, 1), HIDDEN2)
    return (emb, w1, b1, w2, b2, w3, b3)


def nnue_reference(params, feature_indices, offsets_ext):
    """Pure-numpy reference of the PyTorch forward (eval mode), with weights
    quantized to bf16 exactly as the kernel stores them (f32 math otherwise)."""
    emb, w1, b1, w2, b2, w3, b3 = params
    q = lambda a: np.asarray(jnp.asarray(a).astype(jnp.bfloat16), dtype=np.float32)
    embq, w1q, w2q, w3q = q(emb), q(w1), q(w2), q(w3)
    idx = np.asarray(feature_indices)
    off = np.asarray(offsets_ext)
    B = off.shape[0] - 1
    bags = np.stack([embq[idx[off[b]:off[b + 1]]].sum(0) for b in range(B)])
    h1 = np.maximum(bags @ w1q + np.asarray(b1), 0.0)
    h2 = np.maximum(h1 @ w2q + np.asarray(b2), 0.0)
    return h2 @ w3q + np.asarray(b3)


if __name__ == "__main__":
    key = jax.random.PRNGKey(0)
    pkey, ikey = jax.random.split(key)
    params = init_params(pkey)
    kparams = prepare_kernel_params(params)

    # Build a small ragged batch: 4 bags with lengths [5, 8, 3, 7].
    bag_lens = [5, 8, 3, 7]
    B = len(bag_lens)
    total = sum(bag_lens)                       # 23 real indices
    MAX_TOTAL = 32                              # pad to a fixed size
    real_idx = jax.random.randint(ikey, (total,), 0, FEATURE_DIM, jnp.int32)
    feature_indices = jnp.concatenate(
        [real_idx, jnp.zeros((MAX_TOTAL - total,), jnp.int32)])
    offsets = jnp.array(np.cumsum([0] + bag_lens[:-1]), jnp.int32)            # [0, 5, 13, 16]
    offsets_ext = jnp.concatenate([offsets, jnp.array([total], jnp.int32)])   # [..., 23]

    out = nnue_forward(kparams, feature_indices, offsets_ext)
    out = jax.block_until_ready(out)

    ref = nnue_reference(params, feature_indices, offsets_ext)
    assert out.shape == (B, 1)
    np.testing.assert_allclose(np.asarray(out), np.asarray(ref), rtol=5e-3, atol=5e-3)

    print("KERNEL_OK")
</pallas_src>

<mosaic_0001>
module attributes {stable_mosaic.version = 11 : i64} {
  func.func @nnue_kernel(%arg0: i32, %arg1: memref<32x1xi32, #tpu.memory_space<vmem>>, %arg2: memref<8x1xi32, #tpu.memory_space<vmem>>, %arg3: memref<8x1xi32, #tpu.memory_space<vmem>>, %arg4: memref<768x256xbf16, #tpu.memory_space<vmem>>, %arg5: memref<256x32xbf16, #tpu.memory_space<vmem>>, %arg6: memref<1x32xf32, #tpu.memory_space<vmem>>, %arg7: memref<32x16xbf16, #tpu.memory_space<vmem>>, %arg8: memref<1x16xf32, #tpu.memory_space<vmem>>, %arg9: memref<16x128xbf16, #tpu.memory_space<vmem>>, %arg10: memref<1x128xf32, #tpu.memory_space<vmem>>, %arg11: memref<8x128xf32, #tpu.memory_space<vmem>>) attributes {dimension_semantics = [#tpu.dimension_semantics<parallel>], iteration_bounds = array<i64: 1>, scalar_prefetch = 0 : i64, scratch_operands = 0 : i64, tpu.core_type = #tpu.core_type<tc>, window_params = [{pipeline_mode = #tpu.pipeline_mode<synchronous>, transform_indices = @transform_0, window_bounds = array<i64: 32, 1>}, {transform_indices = @transform_1, window_bounds = array<i64: 8, 1>}, {transform_indices = @transform_2, window_bounds = array<i64: 8, 1>}, {pipeline_mode = #tpu.pipeline_mode<synchronous>, transform_indices = @transform_3, window_bounds = array<i64: 768, 256>}, {pipeline_mode = #tpu.pipeline_mode<synchronous>, transform_indices = @transform_4, window_bounds = array<i64: 256, 32>}, {pipeline_mode = #tpu.pipeline_mode<synchronous>, transform_indices = @transform_5, window_bounds = array<i64: 1, 32>}, {pipeline_mode = #tpu.pipeline_mode<synchronous>, transform_indices = @transform_6, window_bounds = array<i64: 32, 16>}, {pipeline_mode = #tpu.pipeline_mode<synchronous>, transform_indices = @transform_7, window_bounds = array<i64: 1, 16>}, {pipeline_mode = #tpu.pipeline_mode<synchronous>, transform_indices = @transform_8, window_bounds = array<i64: 16, 128>}, {pipeline_mode = #tpu.pipeline_mode<synchronous>, transform_indices = @transform_9, window_bounds = array<i64: 1, 128>}, {transform_indices = @transform_10, window_bounds = array<i64: 8, 128>}]} {
    %0 = tpu.iota {dimensions = array<i32: 1>} : vector<32x768xi32>
    %c0 = arith.constant 0 : index
    %c0_0 = arith.constant 0 : index
    %1 = vector.load %arg1[%c0, %c0_0] : memref<32x1xi32, #tpu.memory_space<vmem>>, vector<32x1xi32>
    %2 = vector.broadcast %1 : vector<32x1xi32> to vector<32x768xi32>
    %3 = arith.cmpi eq, %0, %2 : vector<32x768xi32>
    %cst = arith.constant 1.000000e+00 : f32
    %cst_1 = arith.constant 0.000000e+00 : f32
    %4 = vector.broadcast %cst : f32 to vector<32x768xf32>
    %5 = vector.broadcast %cst_1 : f32 to vector<32x768xf32>
    %6 = arith.select %3, %4, %5 : vector<32x768xi1>, vector<32x768xf32>
    %7 = arith.truncf %6 : vector<32x768xf32> to vector<32x768xbf16>
    %8 = tpu.iota {dimensions = array<i32: 1>} : vector<8x32xi32>
    %c0_2 = arith.constant 0 : index
    %c0_3 = arith.constant 0 : index
    %9 = vector.load %arg2[%c0_2, %c0_3] : memref<8x1xi32, #tpu.memory_space<vmem>>, vector<8x1xi32>
    %10 = vector.broadcast %9 : vector<8x1xi32> to vector<8x32xi32>
    %11 = arith.cmpi sge, %8, %10 : vector<8x32xi32>
    %c0_4 = arith.constant 0 : index
    %c0_5 = arith.constant 0 : index
    %12 = vector.load %arg3[%c0_4, %c0_5] : memref<8x1xi32, #tpu.memory_space<vmem>>, vector<8x1xi32>
    %13 = vector.broadcast %12 : vector<8x1xi32> to vector<8x32xi32>
    %14 = arith.cmpi slt, %8, %13 : vector<8x32xi32>
    %15 = arith.andi %11, %14 : vector<8x32xi1>
    %cst_6 = arith.constant 1.000000e+00 : f32
    %cst_7 = arith.constant 0.000000e+00 : f32
    %16 = vector.broadcast %cst_6 : f32 to vector<8x32xf32>
    %17 = vector.broadcast %cst_7 : f32 to vector<8x32xf32>
    %18 = arith.select %15, %16, %17 : vector<8x32xi1>, vector<8x32xf32>
    %19 = arith.truncf %18 : vector<8x32xf32> to vector<8x32xbf16>
    %cst_8 = arith.constant dense<0.000000e+00> : vector<8x768xf32>
    %20 = tpu.matmul %19, %7, %cst_8 {dimension_numbers = #tpu.dot_dimension_numbers<[1], [0], [0], [1], [0, 0, 1, 1], [], []>} : vector<8x32xbf16>, vector<32x768xbf16>, vector<8x768xf32> -> vector<8x768xf32>
    %21 = arith.truncf %20 : vector<8x768xf32> to vector<8x768xbf16>
    %c0_9 = arith.constant 0 : index
    %c0_10 = arith.constant 0 : index
    %22 = vector.load %arg4[%c0_9, %c0_10] : memref<768x256xbf16, #tpu.memory_space<vmem>>, vector<768x256xbf16>
    %cst_11 = arith.constant dense<0.000000e+00> : vector<8x256xf32>
    %23 = tpu.matmul %21, %22, %cst_11 {dimension_numbers = #tpu.dot_dimension_numbers<[1], [0], [0], [1], [0, 0, 1, 1], [], []>} : vector<8x768xbf16>, vector<768x256xbf16>, vector<8x256xf32> -> vector<8x256xf32>
    %24 = arith.truncf %23 : vector<8x256xf32> to vector<8x256xbf16>
    %c0_12 = arith.constant 0 : index
    %c0_13 = arith.constant 0 : index
    %25 = vector.load %arg5[%c0_12, %c0_13] : memref<256x32xbf16, #tpu.memory_space<vmem>>, vector<256x32xbf16>
    %cst_14 = arith.constant dense<0.000000e+00> : vector<8x32xf32>
    %26 = tpu.matmul %24, %25, %cst_14 {dimension_numbers = #tpu.dot_dimension_numbers<[1], [0], [0], [1], [0, 0, 1, 1], [], []>} : vector<8x256xbf16>, vector<256x32xbf16>, vector<8x32xf32> -> vector<8x32xf32>
    %c0_15 = arith.constant 0 : index
    %c0_16 = arith.constant 0 : index
    %27 = vector.load %arg6[%c0_15, %c0_16] : memref<1x32xf32, #tpu.memory_space<vmem>>, vector<1x32xf32>
    %28 = vector.broadcast %27 : vector<1x32xf32> to vector<8x32xf32>
    %29 = arith.addf %26, %28 : vector<8x32xf32>
    %cst_17 = arith.constant 0.000000e+00 : f32
    %30 = vector.broadcast %cst_17 : f32 to vector<8x32xf32>
    %31 = arith.maximumf %29, %30 : vector<8x32xf32>
    %32 = arith.truncf %31 : vector<8x32xf32> to vector<8x32xbf16>
    %c0_18 = arith.constant 0 : index
    %c0_19 = arith.constant 0 : index
    %33 = vector.load %arg7[%c0_18, %c0_19] : memref<32x16xbf16, #tpu.memory_space<vmem>>, vector<32x16xbf16>
    %cst_20 = arith.constant dense<0.000000e+00> : vector<8x16xf32>
    %34 = tpu.matmul %32, %33, %cst_20 {dimension_numbers = #tpu.dot_dimension_numbers<[1], [0], [0], [1], [0, 0, 1, 1], [], []>} : vector<8x32xbf16>, vector<32x16xbf16>, vector<8x16xf32> -> vector<8x16xf32>
    %c0_21 = arith.constant 0 : index
    %c0_22 = arith.constant 0 : index
    %35 = vector.load %arg8[%c0_21, %c0_22] : memref<1x16xf32, #tpu.memory_space<vmem>>, vector<1x16xf32>
    %36 = vector.broadcast %35 : vector<1x16xf32> to vector<8x16xf32>
    %37 = arith.addf %34, %36 : vector<8x16xf32>
    %cst_23 = arith.constant 0.000000e+00 : f32
    %38 = vector.broadcast %cst_23 : f32 to vector<8x16xf32>
    %39 = arith.maximumf %37, %38 : vector<8x16xf32>
    %40 = arith.truncf %39 : vector<8x16xf32> to vector<8x16xbf16>
    %c0_24 = arith.constant 0 : index
    %c0_25 = arith.constant 0 : index
    %41 = vector.load %arg9[%c0_24, %c0_25] : memref<16x128xbf16, #tpu.memory_space<vmem>>, vector<16x128xbf16>
    %cst_26 = arith.constant dense<0.000000e+00> : vector<8x128xf32>
    %42 = tpu.matmul %40, %41, %cst_26 {dimension_numbers = #tpu.dot_dimension_numbers<[1], [0], [0], [1], [0, 0, 1, 1], [], []>} : vector<8x16xbf16>, vector<16x128xbf16>, vector<8x128xf32> -> vector<8x128xf32>
    %c0_27 = arith.constant 0 : index
    %c0_28 = arith.constant 0 : index
    %43 = vector.load %arg10[%c0_27, %c0_28] : memref<1x128xf32, #tpu.memory_space<vmem>>, vector<1x128xf32>
    %44 = vector.broadcast %43 : vector<1x128xf32> to vector<8x128xf32>
    %45 = arith.addf %42, %44 : vector<8x128xf32>
    %c0_29 = arith.constant 0 : index
    %c0_30 = arith.constant 0 : index
    %46 = vector.load %arg11[%c0_29, %c0_30] : memref<8x128xf32, #tpu.memory_space<vmem>>, vector<8x128xf32>
    tpu.vector_store %arg11[%c0_29, %c0_30], %45 {strides = array<i32>} : memref<8x128xf32, #tpu.memory_space<vmem>>, vector<8x128xf32>,
    return
  }
  func.func @transform_0(%arg0: i32) -> (i32, i32) {
    %c0_i32 = arith.constant 0 : i32
    %c0_i32_0 = arith.constant 0 : i32
    %c0_i32_1 = arith.constant 0 : i32
    return %c0_i32, %c0_i32_0 : i32, i32
  }
  func.func @transform_1(%arg0: i32) -> (i32, i32) {
    %c0_i32 = arith.constant 0 : i32
    %c0_i32_0 = arith.constant 0 : i32
    return %arg0, %c0_i32 : i32, i32
  }
  func.func @transform_2(%arg0: i32) -> (i32, i32) {
    %c0_i32 = arith.constant 0 : i32
    %c0_i32_0 = arith.constant 0 : i32
    return %arg0, %c0_i32 : i32, i32
  }
  func.func @transform_3(%arg0: i32) -> (i32, i32) {
    %c0_i32 = arith.constant 0 : i32
    %c0_i32_0 = arith.constant 0 : i32
    %c0_i32_1 = arith.constant 0 : i32
    return %c0_i32, %c0_i32_0 : i32, i32
  }
  func.func @transform_4(%arg0: i32) -> (i32, i32) {
    %c0_i32 = arith.constant 0 : i32
    %c0_i32_0 = arith.constant 0 : i32
    %c0_i32_1 = arith.constant 0 : i32
    return %c0_i32, %c0_i32_0 : i32, i32
  }
  func.func @transform_5(%arg0: i32) -> (i32, i32) {
    %c0_i32 = arith.constant 0 : i32
    %c0_i32_0 = arith.constant 0 : i32
    %c0_i32_1 = arith.constant 0 : i32
    return %c0_i32, %c0_i32_0 : i32, i32
  }
  func.func @transform_6(%arg0: i32) -> (i32, i32) {
    %c0_i32 = arith.constant 0 : i32
    %c0_i32_0 = arith.constant 0 : i32
    %c0_i32_1 = arith.constant 0 : i32
    return %c0_i32, %c0_i32_0 : i32, i32
  }
  func.func @transform_7(%arg0: i32) -> (i32, i32) {
    %c0_i32 = arith.constant 0 : i32
    %c0_i32_0 = arith.constant 0 : i32
    %c0_i32_1 = arith.constant 0 : i32
    return %c0_i32, %c0_i32_0 : i32, i32
  }
  func.func @transform_8(%arg0: i32) -> (i32, i32) {
    %c0_i32 = arith.constant 0 : i32
    %c0_i32_0 = arith.constant 0 : i32
    %c0_i32_1 = arith.constant 0 : i32
    return %c0_i32, %c0_i32_0 : i32, i32
  }
  func.func @transform_9(%arg0: i32) -> (i32, i32) {
    %c0_i32 = arith.constant 0 : i32
    %c0_i32_0 = arith.constant 0 : i32
    %c0_i32_1 = arith.constant 0 : i32
    return %c0_i32, %c0_i32_0 : i32, i32
  }
  func.func @transform_10(%arg0: i32) -> (i32, i32) {
    %c0_i32 = arith.constant 0 : i32
    %c0_i32_0 = arith.constant 0 : i32
    return %arg0, %c0_i32 : i32, i32
  }
}

</mosaic_0001>

<llo_original>
// kernel: tpu_custom_call.1
$region0: #{tpu_custom_call.1}
  #allocation0 [shape = 'u32[]', space=smem, size = 0x4, offset = 0x4, fixed_abs, tag = 'smem constant byte address 0x4 - core index']
  #allocation1 [shape = 'u32[144,128]{1,0:T(1,128)}', space=vmem, size = 0x12000, scoped, tag = 'internal scratch']
  %s0 = inlined_call_operand.vmem [shape: s32[32,1], index: 0, kind: input, shape index: {}]
  %s1 = inlined_call_operand.vmem [shape: s32[8,1], index: 1, kind: input, shape index: {}]
  %s2 = inlined_call_operand.vmem [shape: s32[8,1], index: 2, kind: input, shape index: {}]
  %s3 = inlined_call_operand.hbm [shape: bf16[768,256], index: 3, kind: input, shape index: {}]
  %s4 = inlined_call_operand.vmem [shape: bf16[256,32], index: 4, kind: input, shape index: {}]
  %s5 = inlined_call_operand.vmem [shape: f32[1,32], index: 5, kind: input, shape index: {}]
  %s6 = inlined_call_operand.vmem [shape: bf16[32,16], index: 6, kind: input, shape index: {}]
  %s7 = inlined_call_operand.vmem [shape: f32[1,16], index: 7, kind: input, shape index: {}]
  %s8 = inlined_call_operand.vmem [shape: bf16[16,128], index: 8, kind: input, shape index: {}]
  %s9 = inlined_call_operand.vmem [shape: f32[1,128], index: 9, kind: input, shape index: {}]
  %s10 = inlined_call_operand.hbm [shape: f32[8,128], index: 10, kind: output, shape index: {}]
  %s11 = sld [smem:[#allocation0]]
  $region54: #{tpu_custom_call.1} parent=0
    _
  %s13 = ssub.s32 1, %s11
  %s14 = scalar_select 0, %s13, %s11
  $region1: #{tpu_custom_call.1} parent=0
    #allocation2 [shape = 'u8[393216]{0}', space=vmem, size = 0x60000, scoped, tag = 'input window, operand 3, single buffered']
    #allocation3 [shape = 's32[1]{0}', space=sflag, size = 0x4, scoped, tag = 'scoped memory for tpu_custom_call.1']
    #allocation4 [shape = 's32[1]{0}', space=sflag, size = 0x4, scoped, tag = 'scoped memory for tpu_custom_call.1']
    #allocation5 [shape = 'u8[4096]{0}', space=vmem, size = 0x1000, scoped, tag = 'output window, operand 0, single buffered']
    %15 = vsyncpa [#allocation3], 0
    %16 = vsyncpa [#allocation4], 0
    // Predicated region
    $region2: #{tpu_custom_call.1} parent=1 // pred_check
      _
    $region3: #{tpu_custom_call.1} parent=1 // pred_check_branch
      %18 = sbr.rel (0) target = $region5
    $region4: #{tpu_custom_call.1} parent=1 // pred_region
      _
    $region5: #{tpu_custom_call.1} parent=1 // pred_fallthru
      _
    // Predicated region
    $region6: #{tpu_custom_call.1} parent=1 // pred_check
      _
    $region7: #{tpu_custom_call.1} parent=1 // pred_check_branch
      %20 = sbr.rel (0) target = $region9
    $region8: #{tpu_custom_call.1} parent=1 // pred_region
      _
    $region9: #{tpu_custom_call.1} parent=1 // pred_fallthru
      _
    // Predicated region
    $region10: #{tpu_custom_call.1} parent=1 // pred_check
      _
    $region11: #{tpu_custom_call.1} parent=1 // pred_check_branch
      %22 = sbr.rel (0) target = $region13
    $region12: #{tpu_custom_call.1} parent=1 // pred_region
      _
    $region13: #{tpu_custom_call.1} parent=1 // pred_fallthru
      _
    // Predicated region
    $region14: #{tpu_custom_call.1} parent=1 // pred_check
      _
    $region15: #{tpu_custom_call.1} parent=1 // pred_check_branch
      %24 = sbr.rel (0) target = $region17
    $region16: #{tpu_custom_call.1} parent=1 // pred_region
      %s26 = ssub.s32 12288, 12288
      %27 = vsyncadd [#allocation3], %s26
      %s28 = sshll.u32 [#allocation2], 4
      %s29 = int_to_ptr.vmem [resolvable:$true] %s28
      %34 = dma.hbm_to_vmem [thread:$0]  %s3, 12288, %s29, [#allocation3], 128, 128, 8
    $region17: #{tpu_custom_call.1} parent=1 // pred_fallthru
      _
    // Predicated region
    $region18: #{tpu_custom_call.1} parent=1 // pred_check
      _
    $region19: #{tpu_custom_call.1} parent=1 // pred_check_branch
      %36 = sbr.rel (0) target = $region21
    $region20: #{tpu_custom_call.1} parent=1 // pred_region
      _
    $region21: #{tpu_custom_call.1} parent=1 // pred_fallthru
      _
    // Predicated region
    $region22: #{tpu_custom_call.1} parent=1 // pred_check
      _
    $region23: #{tpu_custom_call.1} parent=1 // pred_check_branch
      %38 = sbr.rel (0) target = $region25
    $region24: #{tpu_custom_call.1} parent=1 // pred_region
      _
    $region25: #{tpu_custom_call.1} parent=1 // pred_fallthru
      _
    // Predicated region
    $region26: #{tpu_custom_call.1} parent=1 // pred_check
      _
    $region27: #{tpu_custom_call.1} parent=1 // pred_check_branch
      %40 = sbr.rel (0) target = $region29
    $region28: #{tpu_custom_call.1} parent=1 // pred_region
      _
    $region29: #{tpu_custom_call.1} parent=1 // pred_fallthru
      _
    // Predicated region
    $region30: #{tpu_custom_call.1} parent=1 // pred_check
      _
    $region31: #{tpu_custom_call.1} parent=1 // pred_check_branch
      %42 = sbr.rel (0) target = $region33
    $region32: #{tpu_custom_call.1} parent=1 // pred_region
      _
    $region33: #{tpu_custom_call.1} parent=1 // pred_fallthru
      _
    // Predicated region
    $region34: #{tpu_custom_call.1} parent=1 // pred_check
      _
    $region35: #{tpu_custom_call.1} parent=1 // pred_check_branch
      %44 = sbr.rel (0) target = $region37
    $region36: #{tpu_custom_call.1} parent=1 // pred_region
      _
    $region37: #{tpu_custom_call.1} parent=1 // pred_fallthru
      _
    // Predicated region
    $region38: #{tpu_custom_call.1} parent=1 // pred_check
      _
    $region39: #{tpu_custom_call.1} parent=1 // pred_check_branch
      %46 = sbr.rel (0) target = $region41
    $region40: #{tpu_custom_call.1} parent=1 // pred_region
      _
    $region41: #{tpu_custom_call.1} parent=1 // pred_fallthru
      _
    // Predicated region
    $region42: #{tpu_custom_call.1} parent=1 // pred_check
      _
    $region43: #{tpu_custom_call.1} parent=1 // pred_check_branch
      %48 = sbr.rel (0) target = $region45
    $region44: #{tpu_custom_call.1} parent=1 // pred_region
      %49 = dma.done [#allocation3], 12288
    $region45: #{tpu_custom_call.1} parent=1 // pred_fallthru
      _
    %v51 = vlaneseq
    %v52 = vand.u32 %v51, 127
    %v53 = vadd.s32 %v52, 128
    %v54 = vadd.s32 %v52, 256
    %v55 = vadd.s32 %v52, 384
    %v56 = vadd.s32 %v52, 512
    %v57 = vadd.s32 %v52, 640
    %v58 = vld [vmem:[%s0] sm:$0xff]
    %v59 = vld [vmem:[%s0 + $0x8] sm:$0xff]
    %v60 = vld [vmem:[%s0 + $0x10] sm:$0xff]
    %v61 = vld [vmem:[%s0 + $0x18] sm:$0xff]
    %62 = vset.pattern.permute.xlu0 0
    %63 = vperm.xlu0 %62, %v58
    %v64 = vpop.permute.xlu0 %63
    %65 = vset.pattern.permute.xlu0 0
    %66 = vperm.xlu0 %65, %v59
    %v67 = vpop.permute.xlu0 %66
    %68 = vset.pattern.permute.xlu0 0
    %69 = vperm.xlu0 %68, %v60
    %v70 = vpop.permute.xlu0 %69
    %71 = vset.pattern.permute.xlu0 0
    %72 = vperm.xlu0 %71, %v61
    %v73 = vpop.permute.xlu0 %72
    %vm74 = vcmp.eq.s32.totalorder %v52, %v64
    %vm75 = vcmp.eq.s32.totalorder %v53, %v64
    %vm76 = vcmp.eq.s32.totalorder %v54, %v64
    %vm77 = vcmp.eq.s32.totalorder %v55, %v64
    %vm78 = vcmp.eq.s32.totalorder %v56, %v64
    %vm79 = vcmp.eq.s32.totalorder %v57, %v64
    %vm80 = vcmp.eq.s32.totalorder %v52, %v67
    %vm81 = vcmp.eq.s32.totalorder %v53, %v67
    %vm82 = vcmp.eq.s32.totalorder %v54, %v67
    %vm83 = vcmp.eq.s32.totalorder %v55, %v67
    %vm84 = vcmp.eq.s32.totalorder %v56, %v67
    %vm85 = vcmp.eq.s32.totalorder %v57, %v67
    %vm86 = vcmp.eq.s32.totalorder %v52, %v70
    %vm87 = vcmp.eq.s32.totalorder %v53, %v70
    %vm88 = vcmp.eq.s32.totalorder %v54, %v70
    %vm89 = vcmp.eq.s32.totalorder %v55, %v70
    %vm90 = vcmp.eq.s32.totalorder %v56, %v70
    %vm91 = vcmp.eq.s32.totalorder %v57, %v70
    %vm92 = vcmp.eq.s32.totalorder %v52, %v73
    %vm93 = vcmp.eq.s32.totalorder %v53, %v73
    %vm94 = vcmp.eq.s32.totalorder %v54, %v73
    %vm95 = vcmp.eq.s32.totalorder %v55, %v73
    %vm96 = vcmp.eq.s32.totalorder %v56, %v73
    %vm97 = vcmp.eq.s32.totalorder %v57, %v73
    %v98 = vsel %vm74, 1.0, 0.0
    %v99 = vsel %vm75, 1.0, 0.0
    %v100 = vsel %vm76, 1.0, 0.0
    %v101 = vsel %vm77, 1.0, 0.0
    %v102 = vsel %vm78, 1.0, 0.0
    %v103 = vsel %vm79, 1.0, 0.0
    %v104 = vsel %vm80, 1.0, 0.0
    %v105 = vsel %vm81, 1.0, 0.0
    %v106 = vsel %vm82, 1.0, 0.0
    %v107 = vsel %vm83, 1.0, 0.0
    %v108 = vsel %vm84, 1.0, 0.0
    %v109 = vsel %vm85, 1.0, 0.0
    %v110 = vsel %vm86, 1.0, 0.0
    %v111 = vsel %vm87, 1.0, 0.0
    %v112 = vsel %vm88, 1.0, 0.0
    %v113 = vsel %vm89, 1.0, 0.0
    %v114 = vsel %vm90, 1.0, 0.0
    %v115 = vsel %vm91, 1.0, 0.0
    %v116 = vsel %vm92, 1.0, 0.0
    %v117 = vsel %vm93, 1.0, 0.0
    %v118 = vsel %vm94, 1.0, 0.0
    %v119 = vsel %vm95, 1.0, 0.0
    %v120 = vsel %vm96, 1.0, 0.0
    %v121 = vsel %vm97, 1.0, 0.0
    %v122 = vpack.c.bf16 %v104, %v98
    %v123 = vpack.c.bf16 %v105, %v99
    %v124 = vpack.c.bf16 %v106, %v100
    %v125 = vpack.c.bf16 %v107, %v101
    %v126 = vpack.c.bf16 %v108, %v102
    %v127 = vpack.c.bf16 %v109, %v103
    %v128 = vpack.c.bf16 %v116, %v110
    %v129 = vpack.c.bf16 %v117, %v111
    %v130 = vpack.c.bf16 %v118, %v112
    %v131 = vpack.c.bf16 %v119, %v113
    %v132 = vpack.c.bf16 %v120, %v114
    %v133 = vpack.c.bf16 %v121, %v115
    %v134 = vld [vmem:[%s1] sm:$0xff]
    %135 = vset.pattern.permute.xlu0 0
    %136 = vperm.xlu0 %135, %v134
    %v137 = vpop.permute.xlu0 %136
    %vm138 = vcmp.ge.s32.totalorder %v52, %v137
    %v139 = vld [vmem:[%s2] sm:$0xff]
    %140 = vset.pattern.permute.xlu0 0
    %141 = vperm.xlu0 %140, %v139
    %v142 = vpop.permute.xlu0 %141
    %vm143 = vcmp.lt.s32.totalorder %v52, %v142
    %vm144 = vmand %vm138, %vm143
    %v145 = vsel %vm144, 1.0, 0.0
    %v146 = vpack.c.bf16 %v145, %v145
    %vm147 = vcmask 261120
    %v149 = vsel %vm147, %v146, 0
    %151 = vmatprep.subr.bf16.mxu0 %v123
    %152 = vmatpush1.bf16.msra.mxu0 %v122
    %153 = vmatprep.subr.bf16.mxu0 %v129
    %154 = vmatpush1.bf16.msra.mxu0 %v128
    %155 = vmatprep.subr.bf16.mxu0 0
    %156 = vmatpush1.bf16.msra.mxu0 0
    %157 = vmatprep.subr.bf16.mxu0 0
    %158 = vmatpush1.bf16.msra.mxu0 0
    %159 = vmatprep.subr.bf16.mxu0 0
    %160 = vmatpush1.bf16.msra.mxu0 0
    %161 = vmatprep.subr.bf16.mxu0 0
    %162 = vmatpush1.bf16.msra.mxu0 0
    %163 = vmatprep.subr.bf16.mxu0 0
    %164 = vmatpush1.bf16.msra.mxu0 0
    %165 = vmatprep.subr.bf16.mxu0 0
    %166 = vmatpush1.bf16.msra.mxu0 0
    %167 = vmatprep.subr.bf16.mxu0 0
    %168 = vmatpush1.bf16.msra.mxu0 0
    %169 = vmatprep.subr.bf16.mxu0 0
    %170 = vmatpush1.bf16.msra.mxu0 0
    %171 = vmatprep.subr.bf16.mxu0 0
    %172 = vmatpush1.bf16.msra.mxu0 0
    %173 = vmatprep.subr.bf16.mxu0 0
    %174 = vmatpush1.bf16.msra.mxu0 0
    %175 = vmatprep.subr.bf16.mxu0 0
    %176 = vmatpush1.bf16.msra.mxu0 0
    %177 = vmatprep.subr.bf16.mxu0 0
    %178 = vmatpush1.bf16.msra.mxu0 0
    %179 = vmatprep.subr.bf16.mxu0 0
    %180 = vmatpush1.bf16.msra.mxu0 0
    %181 = vmatprep.subr.bf16.mxu0 0
    %182 = vmatpush1.bf16.msra.mxu0 0
    %183 = vmatprep.mubr.bf16.mxu0 0
    %184 = vmatmul.mubr.bf16.gmra.mrb[0].mxu0 %v149
    %v185 = vpop.f32.mrb[0].mxu0
    %v186 = vadd.f32 0.0, %v185
    %v187 = vpop.f32.mrb[0].mxu0
    %v188 = vadd.f32 0.0, %v187
    %v189 = vpop.f32.mrb[0].mxu0
    %v190 = vpop.f32.mrb[0].mxu0
    %191 = vdwg.mxu0
    %192 = vmatprep.subr.bf16.mxu0 %v125
    %193 = vmatpush1.bf16.msra.mxu0 %v124
    %194 = vmatprep.subr.bf16.mxu0 %v131
    %195 = vmatpush1.bf16.msra.mxu0 %v130
    %196 = vmatprep.subr.bf16.mxu0 0
    %197 = vmatpush1.bf16.msra.mxu0 0
    %198 = vmatprep.subr.bf16.mxu0 0
    %199 = vmatpush1.bf16.msra.mxu0 0
    %200 = vmatprep.subr.bf16.mxu0 0
    %201 = vmatpush1.bf16.msra.mxu0 0
    %202 = vmatprep.subr.bf16.mxu0 0
    %203 = vmatpush1.bf16.msra.mxu0 0
    %204 = vmatprep.subr.bf16.mxu0 0
    %205 = vmatpush1.bf16.msra.mxu0 0
    %206 = vmatprep.subr.bf16.mxu0 0
    %207 = vmatpush1.bf16.msra.mxu0 0
    %208 = vmatprep.subr.bf16.mxu0 0
    %209 = vmatpush1.bf16.msra.mxu0 0
    %210 = vmatprep.subr.bf16.mxu0 0
    %211 = vmatpush1.bf16.msra.mxu0 0
    %212 = vmatprep.subr.bf16.mxu0 0
    %213 = vmatpush1.bf16.msra.mxu0 0
    %214 = vmatprep.subr.bf16.mxu0 0
    %215 = vmatpush1.bf16.msra.mxu0 0
    %216 = vmatprep.subr.bf16.mxu0 0
    %217 = vmatpush1.bf16.msra.mxu0 0
    %218 = vmatprep.subr.bf16.mxu0 0
    %219 = vmatpush1.bf16.msra.mxu0 0
    %220 = vmatprep.subr.bf16.mxu0 0
    %221 = vmatpush1.bf16.msra.mxu0 0
    %222 = vmatprep.subr.bf16.mxu0 0
    %223 = vmatpush1.bf16.msra.mxu0 0
    %224 = vmatprep.mubr.bf16.mxu0 0
    %225 = vmatmul.mubr.bf16.gmra.mrb[0].mxu0 %v149
    %v226 = vpop.f32.mrb[0].mxu0
    %v227 = vadd.f32 0.0, %v226
    %v228 = vpop.f32.mrb[0].mxu0
    %v229 = vadd.f32 0.0, %v228
    %v230 = vpop.f32.mrb[0].mxu0
    %v231 = vpop.f32.mrb[0].mxu0
    %232 = vdwg.mxu0
    %233 = vmatprep.subr.bf16.mxu0 %v127
    %234 = vmatpush1.bf16.msra.mxu0 %v126
    %235 = vmatprep.subr.bf16.mxu0 %v133
    %236 = vmatpush1.bf16.msra.mxu0 %v132
    %237 = vmatprep.subr.bf16.mxu0 0
    %238 = vmatpush1.bf16.msra.mxu0 0
    %239 = vmatprep.subr.bf16.mxu0 0
    %240 = vmatpush1.bf16.msra.mxu0 0
    %241 = vmatprep.subr.bf16.mxu0 0
    %242 = vmatpush1.bf16.msra.mxu0 0
    %243 = vmatprep.subr.bf16.mxu0 0
    %244 = vmatpush1.bf16.msra.mxu0 0
    %245 = vmatprep.subr.bf16.mxu0 0
    %246 = vmatpush1.bf16.msra.mxu0 0
    %247 = vmatprep.subr.bf16.mxu0 0
    %248 = vmatpush1.bf16.msra.mxu0 0
    %249 = vmatprep.subr.bf16.mxu0 0
    %250 = vmatpush1.bf16.msra.mxu0 0
    %251 = vmatprep.subr.bf16.mxu0 0
    %252 = vmatpush1.bf16.msra.mxu0 0
    %253 = vmatprep.subr.bf16.mxu0 0
    %254 = vmatpush1.bf16.msra.mxu0 0
    %255 = vmatprep.subr.bf16.mxu0 0
    %256 = vmatpush1.bf16.msra.mxu0 0
    %257 = vmatprep.subr.bf16.mxu0 0
    %258 = vmatpush1.bf16.msra.mxu0 0
    %259 = vmatprep.subr.bf16.mxu0 0
    %260 = vmatpush1.bf16.msra.mxu0 0
    %261 = vmatprep.subr.bf16.mxu0 0
    %262 = vmatpush1.bf16.msra.mxu0 0
    %263 = vmatprep.subr.bf16.mxu0 0
    %264 = vmatpush1.bf16.msra.mxu0 0
    %265 = vmatprep.mubr.bf16.mxu0 0
    %266 = vmatmul.mubr.bf16.gmra.mrb[0].mxu0 %v149
    %v267 = vpop.f32.mrb[0].mxu0
    %v268 = vadd.f32 0.0, %v267
    %v269 = vpop.f32.mrb[0].mxu0
    %v270 = vadd.f32 0.0, %v269
    %v271 = vpop.f32.mrb[0].mxu0
    %v272 = vpop.f32.mrb[0].mxu0
    %273 = vdwg.mxu0
    %v274 = vpack.c.bf16 %v186, %v186
    %v275 = vpack.c.bf16 %v188, %v188
    %v276 = vpack.c.bf16 %v227, %v227
    %v277 = vpack.c.bf16 %v229, %v229
    %v278 = vpack.c.bf16 %v268, %v268
    %v279 = vpack.c.bf16 %v270, %v270
    %v280 = vld [vmem:[#allocation2] sm:$0xff]
    %v281 = vld [vmem:[#allocation2 + $0x8] sm:$0xff]
    %v282 = vld [vmem:[#allocation2 + $0x10] sm:$0xff]
    %v283 = vld [vmem:[#allocation2 + $0x18] sm:$0xff]
    %v284 = vld [vmem:[#allocation2 + $0x20] sm:$0xff]
    %v285 = vld [vmem:[#allocation2 + $0x28] sm:$0xff]
    %v286 = vld [vmem:[#allocation2 + $0x30] sm:$0xff]
    %v287 = vld [vmem:[#allocation2 + $0x38] sm:$0xff]
    %v288 = vld [vmem:[#allocation2 + $0x40] sm:$0xff]
    %v289 = vld [vmem:[#allocation2 + $0x48] sm:$0xff]
    %v290 = vld [vmem:[#allocation2 + $0x50] sm:$0xff]
    %v291 = vld [vmem:[#allocation2 + $0x58] sm:$0xff]
    %v292 = vld [vmem:[#allocation2 + $0x60] sm:$0xff]
    %v293 = vld [vmem:[#allocation2 + $0x68] sm:$0xff]
    %v294 = vld [vmem:[#allocation2 + $0x70] sm:$0xff]
    %v295 = vld [vmem:[#allocation2 + $0x78] sm:$0xff]
    %v296 = vld [vmem:[#allocation2 + $0x80] sm:$0xff]
    %v297 = vld [vmem:[#allocation2 + $0x88] sm:$0xff]
    %v298 = vld [vmem:[#allocation2 + $0x90] sm:$0xff]
    %v299 = vld [vmem:[#allocation2 + $0x98] sm:$0xff]
    %v300 = vld [vmem:[#allocation2 + $0xa0] sm:$0xff]
    %v301 = vld [vmem:[#allocation2 + $0xa8] sm:$0xff]
    %v302 = vld [vmem:[#allocation2 + $0xb0] sm:$0xff]
    %v303 = vld [vmem:[#allocation2 + $0xb8] sm:$0xff]
    %v304 = vld [vmem:[#allocation2 + $0xc0] sm:$0xff]
    %v305 = vld [vmem:[#allocation2 + $0xc8] sm:$0xff]
    %v306 = vld [vmem:[#allocation2 + $0xd0] sm:$0xff]
    %v307 = vld [vmem:[#allocation2 + $0xd8] sm:$0xff]
    %v308 = vld [vmem:[#allocation2 + $0xe0] sm:$0xff]
    %v309 = vld [vmem:[#allocation2 + $0xe8] sm:$0xff]
    %v310 = vld [vmem:[#allocation2 + $0xf0] sm:$0xff]
    %v311 = vld [vmem:[#allocation2 + $0xf8] sm:$0xff]
    %v312 = vld [vmem:[#allocation2 + $0x100] sm:$0xff]
    %v313 = vld [vmem:[#allocation2 + $0x108] sm:$0xff]
    %v314 = vld [vmem:[#allocation2 + $0x110] sm:$0xff]
    %v315 = vld [vmem:[#allocation2 + $0x118] sm:$0xff]
    %v316 = vld [vmem:[#allocation2 + $0x120] sm:$0xff]
    %v317 = vld [vmem:[#allocation2 + $0x128] sm:$0xff]
    %v318 = vld [vmem:[#allocation2 + $0x130] sm:$0xff]
    %v319 = vld [vmem:[#allocation2 + $0x138] sm:$0xff]
    %v320 = vld [vmem:[#allocation2 + $0x140] sm:$0xff]
    %v321 = vld [vmem:[#allocation2 + $0x148] sm:$0xff]
    %v322 = vld [vmem:[#allocation2 + $0x150] sm:$0xff]
    %v323 = vld [vmem:[#allocation2 + $0x158] sm:$0xff]
    %v324 = vld [vmem:[#allocation2 + $0x160] sm:$0xff]
    %v325 = vld [vmem:[#allocation2 + $0x168] sm:$0xff]
    %v326 = vld [vmem:[#allocation2 + $0x170] sm:$0xff]
    %v327 = vld [vmem:[#allocation2 + $0x178] sm:$0xff]
    %v328 = vld [vmem:[#allocation2 + $0x180] sm:$0xff]
    %v329 = vld [vmem:[#allocation2 + $0x188] sm:$0xff]
    %v330 = vld [vmem:[#allocation2 + $0x190] sm:$0xff]
    %v331 = vld [vmem:[#allocation2 + $0x198] sm:$0xff]
    %v332 = vld [vmem:[#allocation2 + $0x1a0] sm:$0xff]
    %v333 = vld [vmem:[#allocation2 + $0x1a8] sm:$0xff]
    %v334 = vld [vmem:[#allocation2 + $0x1b0] sm:$0xff]
    %v335 = vld [vmem:[#allocation2 + $0x1b8] sm:$0xff]
    %v336 = vld [vmem:[#allocation2 + $0x1c0] sm:$0xff]
    %v337 = vld [vmem:[#allocation2 + $0x1c8] sm:$0xff]
    %v338 = vld [vmem:[#allocation2 + $0x1d0] sm:$0xff]
    %v339 = vld [vmem:[#allocation2 + $0x1d8] sm:$0xff]
    %v340 = vld [vmem:[#allocation2 + $0x1e0] sm:$0xff]
    %v341 = vld [vmem:[#allocation2 + $0x1e8] sm:$0xff]
    %v342 = vld [vmem:[#allocation2 + $0x1f0] sm:$0xff]
    %v343 = vld [vmem:[#allocation2 + $0x1f8] sm:$0xff]
    %v344 = vld [vmem:[#allocation2 + $0x200] sm:$0xff]
    %v345 = vld [vmem:[#allocation2 + $0x208] sm:$0xff]
    %v346 = vld [vmem:[#allocation2 + $0x210] sm:$0xff]
    %v347 = vld [vmem:[#allocation2 + $0x218] sm:$0xff]
    %v348 = vld [vmem:[#allocation2 + $0x220] sm:$0xff]
    %v349 = vld [vmem:[#allocation2 + $0x228] sm:$0xff]
    %v350 = vld [vmem:[#allocation2 + $0x230] sm:$0xff]
    %v351 = vld [vmem:[#allocation2 + $0x238] sm:$0xff]
    %v352 = vld [vmem:[#allocation2 + $0x240] sm:$0xff]
    %v353 = vld [vmem:[#allocation2 + $0x248] sm:$0xff]
    %v354 = vld [vmem:[#allocation2 + $0x250] sm:$0xff]
    %v355 = vld [vmem:[#allocation2 + $0x258] sm:$0xff]
    %v356 = vld [vmem:[#allocation2 + $0x260] sm:$0xff]
    %v357 = vld [vmem:[#allocation2 + $0x268] sm:$0xff]
    %v358 = vld [vmem:[#allocation2 + $0x270] sm:$0xff]
    %v359 = vld [vmem:[#allocation2 + $0x278] sm:$0xff]
    %v360 = vld [vmem:[#allocation2 + $0x280] sm:$0xff]
    %v361 = vld [vmem:[#allocation2 + $0x288] sm:$0xff]
    %v362 = vld [vmem:[#allocation2 + $0x290] sm:$0xff]
    %v363 = vld [vmem:[#allocation2 + $0x298] sm:$0xff]
    %v364 = vld [vmem:[#allocation2 + $0x2a0] sm:$0xff]
    %v365 = vld [vmem:[#allocation2 + $0x2a8] sm:$0xff]
    %v366 = vld [vmem:[#allocation2 + $0x2b0] sm:$0xff]
    %v367 = vld [vmem:[#allocation2 + $0x2b8] sm:$0xff]
    %v368 = vld [vmem:[#allocation2 + $0x2c0] sm:$0xff]
    %v369 = vld [vmem:[#allocation2 + $0x2c8] sm:$0xff]
    %v370 = vld [vmem:[#allocation2 + $0x2d0] sm:$0xff]
    %v371 = vld [vmem:[#allocation2 + $0x2d8] sm:$0xff]
    %v372 = vld [vmem:[#allocation2 + $0x2e0] sm:$0xff]
    %v373 = vld [vmem:[#allocation2 + $0x2e8] sm:$0xff]
    %v374 = vld [vmem:[#allocation2 + $0x2f0] sm:$0xff]
    %v375 = vld [vmem:[#allocation2 + $0x2f8] sm:$0xff]
    %v472 = vunpack.c.l.b16 %v280
    %v473 = vunpack.c.h.b16 %v280
    %v474 = vunpack.c.l.b16 %v281
    %v475 = vunpack.c.h.b16 %v281
    %v476 = vunpack.c.l.b16 %v282
    %v477 = vunpack.c.h.b16 %v282
    %v478 = vunpack.c.l.b16 %v283
    %v479 = vunpack.c.h.b16 %v283
    %v480 = vunpack.c.l.b16 %v284
    %v481 = vunpack.c.h.b16 %v284
    %v482 = vunpack.c.l.b16 %v285
    %v483 = vunpack.c.h.b16 %v285
    %v484 = vunpack.c.l.b16 %v286
    %v485 = vunpack.c.h.b16 %v286
    %v486 = vunpack.c.l.b16 %v287
    %v487 = vunpack.c.h.b16 %v287
    %v488 = vunpack.c.l.b16 %v288
    %v489 = vunpack.c.h.b16 %v288
    %v490 = vunpack.c.l.b16 %v289
    %v491 = vunpack.c.h.b16 %v289
    %v492 = vunpack.c.l.b16 %v290
    %v493 = vunpack.c.h.b16 %v290
    %v494 = vunpack.c.l.b16 %v291
    %v495 = vunpack.c.h.b16 %v291
    %v496 = vunpack.c.l.b16 %v292
    %v497 = vunpack.c.h.b16 %v292
    %v498 = vunpack.c.l.b16 %v293
    %v499 = vunpack.c.h.b16 %v293
    %v500 = vunpack.c.l.b16 %v294
    %v501 = vunpack.c.h.b16 %v294
    %v502 = vunpack.c.l.b16 %v295
    %v503 = vunpack.c.h.b16 %v295
    %v504 = vunpack.c.l.b16 %v296
    %v505 = vunpack.c.h.b16 %v296
    %v506 = vunpack.c.l.b16 %v297
    %v507 = vunpack.c.h.b16 %v297
    %v508 = vunpack.c.l.b16 %v298
    %v509 = vunpack.c.h.b16 %v298
    %v510 = vunpack.c.l.b16 %v299
    %v511 = vunpack.c.h.b16 %v299
    %v512 = vunpack.c.l.b16 %v300
    %v513 = vunpack.c.h.b16 %v300
    %v514 = vunpack.c.l.b16 %v301
    %v515 = vunpack.c.h.b16 %v301
    %v516 = vunpack.c.l.b16 %v302
    %v517 = vunpack.c.h.b16 %v302
    %v518 = vunpack.c.l.b16 %v303
    %v519 = vunpack.c.h.b16 %v303
    %v520 = vunpack.c.l.b16 %v304
    %v521 = vunpack.c.h.b16 %v304
    %v522 = vunpack.c.l.b16 %v305
    %v523 = vunpack.c.h.b16 %v305
    %v524 = vunpack.c.l.b16 %v306
    %v525 = vunpack.c.h.b16 %v306
    %v526 = vunpack.c.l.b16 %v307
    %v527 = vunpack.c.h.b16 %v307
    %v528 = vunpack.c.l.b16 %v308
    %v529 = vunpack.c.h.b16 %v308
    %v530 = vunpack.c.l.b16 %v309
    %v531 = vunpack.c.h.b16 %v309
    %v532 = vunpack.c.l.b16 %v310
    %v533 = vunpack.c.h.b16 %v310
    %v534 = vunpack.c.l.b16 %v311
    %v535 = vunpack.c.h.b16 %v311
    %v536 = vunpack.c.l.b16 %v312
    %v537 = vunpack.c.h.b16 %v312
    %v538 = vunpack.c.l.b16 %v313
    %v539 = vunpack.c.h.b16 %v313
    %v540 = vunpack.c.l.b16 %v314
    %v541 = vunpack.c.h.b16 %v314
    %v542 = vunpack.c.l.b16 %v315
    %v543 = vunpack.c.h.b16 %v315
    %v544 = vunpack.c.l.b16 %v316
    %v545 = vunpack.c.h.b16 %v316
    %v546 = vunpack.c.l.b16 %v317
    %v547 = vunpack.c.h.b16 %v317
    %v548 = vunpack.c.l.b16 %v318
    %v549 = vunpack.c.h.b16 %v318
    %v550 = vunpack.c.l.b16 %v319
    %v551 = vunpack.c.h.b16 %v319
    %v552 = vunpack.c.l.b16 %v320
    %v553 = vunpack.c.h.b16 %v320
    %v554 = vunpack.c.l.b16 %v321
    %v555 = vunpack.c.h.b16 %v321
    %v556 = vunpack.c.l.b16 %v322
    %v557 = vunpack.c.h.b16 %v322
    %v558 = vunpack.c.l.b16 %v323
    %v559 = vunpack.c.h.b16 %v323
    %v560 = vunpack.c.l.b16 %v324
    %v561 = vunpack.c.h.b16 %v324
    %v562 = vunpack.c.l.b16 %v325
    %v563 = vunpack.c.h.b16 %v325
    %v564 = vunpack.c.l.b16 %v326
    %v565 = vunpack.c.h.b16 %v326
    %v566 = vunpack.c.l.b16 %v327
    %v567 = vunpack.c.h.b16 %v327
    %v568 = vunpack.c.l.b16 %v328
    %v569 = vunpack.c.h.b16 %v328
    %v570 = vunpack.c.l.b16 %v329
    %v571 = vunpack.c.h.b16 %v329
    %v572 = vunpack.c.l.b16 %v330
    %v573 = vunpack.c.h.b16 %v330
    %v574 = vunpack.c.l.b16 %v331
    %v575 = vunpack.c.h.b16 %v331
    %v576 = vunpack.c.l.b16 %v332
    %v577 = vunpack.c.h.b16 %v332
    %v578 = vunpack.c.l.b16 %v333
    %v579 = vunpack.c.h.b16 %v333
    %v580 = vunpack.c.l.b16 %v334
    %v581 = vunpack.c.h.b16 %v334
    %v582 = vunpack.c.l.b16 %v335
    %v583 = vunpack.c.h.b16 %v335
    %v584 = vunpack.c.l.b16 %v336
    %v585 = vunpack.c.h.b16 %v336
    %v586 = vunpack.c.l.b16 %v337
    %v587 = vunpack.c.h.b16 %v337
    %v588 = vunpack.c.l.b16 %v338
    %v589 = vunpack.c.h.b16 %v338
    %v590 = vunpack.c.l.b16 %v339
    %v591 = vunpack.c.h.b16 %v339
    %v592 = vunpack.c.l.b16 %v340
    %v593 = vunpack.c.h.b16 %v340
    %v594 = vunpack.c.l.b16 %v341
    %v595 = vunpack.c.h.b16 %v341
    %v596 = vunpack.c.l.b16 %v342
    %v597 = vunpack.c.h.b16 %v342
    %v598 = vunpack.c.l.b16 %v343
    %v599 = vunpack.c.h.b16 %v343
    %v600 = vunpack.c.l.b16 %v344
    %v601 = vunpack.c.h.b16 %v344
    %v602 = vunpack.c.l.b16 %v345
    %v603 = vunpack.c.h.b16 %v345
    %v604 = vunpack.c.l.b16 %v346
    %v605 = vunpack.c.h.b16 %v346
    %v606 = vunpack.c.l.b16 %v347
    %v607 = vunpack.c.h.b16 %v347
    %v608 = vunpack.c.l.b16 %v348
    %v609 = vunpack.c.h.b16 %v348
    %v610 = vunpack.c.l.b16 %v349
    %v611 = vunpack.c.h.b16 %v349
    %v612 = vunpack.c.l.b16 %v350
    %v613 = vunpack.c.h.b16 %v350
    %v614 = vunpack.c.l.b16 %v351
    %v615 = vunpack.c.h.b16 %v351
    %v616 = vunpack.c.l.b16 %v352
    %v617 = vunpack.c.h.b16 %v352
    %v618 = vunpack.c.l.b16 %v353
    %v619 = vunpack.c.h.b16 %v353
    %v620 = vunpack.c.l.b16 %v354
    %v621 = vunpack.c.h.b16 %v354
    %v622 = vunpack.c.l.b16 %v355
    %v623 = vunpack.c.h.b16 %v355
    %v624 = vunpack.c.l.b16 %v356
    %v625 = vunpack.c.h.b16 %v356
    %v626 = vunpack.c.l.b16 %v357
    %v627 = vunpack.c.h.b16 %v357
    %v628 = vunpack.c.l.b16 %v358
    %v629 = vunpack.c.h.b16 %v358
    %v630 = vunpack.c.l.b16 %v359
    %v631 = vunpack.c.h.b16 %v359
    %v632 = vunpack.c.l.b16 %v360
    %v633 = vunpack.c.h.b16 %v360
    %v634 = vunpack.c.l.b16 %v361
    %v635 = vunpack.c.h.b16 %v361
    %v636 = vunpack.c.l.b16 %v362
    %v637 = vunpack.c.h.b16 %v362
    %v638 = vunpack.c.l.b16 %v363
    %v639 = vunpack.c.h.b16 %v363
    %v640 = vunpack.c.l.b16 %v364
    %v641 = vunpack.c.h.b16 %v364
    %v642 = vunpack.c.l.b16 %v365
    %v643 = vunpack.c.h.b16 %v365
    %v644 = vunpack.c.l.b16 %v366
    %v645 = vunpack.c.h.b16 %v366
    %v646 = vunpack.c.l.b16 %v367
    %v647 = vunpack.c.h.b16 %v367
    %v648 = vunpack.c.l.b16 %v368
    %v649 = vunpack.c.h.b16 %v368
    %v650 = vunpack.c.l.b16 %v369
    %v651 = vunpack.c.h.b16 %v369
    %v652 = vunpack.c.l.b16 %v370
    %v653 = vunpack.c.h.b16 %v370
    %v654 = vunpack.c.l.b16 %v371
    %v655 = vunpack.c.h.b16 %v371
    %v656 = vunpack.c.l.b16 %v372
    %v657 = vunpack.c.h.b16 %v372
    %v658 = vunpack.c.l.b16 %v373
    %v659 = vunpack.c.h.b16 %v373
    %v660 = vunpack.c.l.b16 %v374
    %v661 = vunpack.c.h.b16 %v374
    %v662 = vunpack.c.l.b16 %v375
    %v663 = vunpack.c.h.b16 %v375
    %v664 = vpack.c.b16 %v474, %v472
    %v665 = vpack.c.b16 %v475, %v473
    %v666 = vpack.c.b16 %v478, %v476
    %v667 = vpack.c.b16 %v479, %v477
    %v668 = vpack.c.b16 %v482, %v480
    %v669 = vpack.c.b16 %v483, %v481
    %v670 = vpack.c.b16 %v486, %v484
    %v671 = vpack.c.b16 %v487, %v485
    %v672 = vpack.c.b16 %v490, %v488
    %v673 = vpack.c.b16 %v491, %v489
    %v674 = vpack.c.b16 %v494, %v492
    %v675 = vpack.c.b16 %v495, %v493
    %v676 = vpack.c.b16 %v498, %v496
    %v677 = vpack.c.b16 %v499, %v497
    %v678 = vpack.c.b16 %v502, %v500
    %v679 = vpack.c.b16 %v503, %v501
    %v680 = vpack.c.b16 %v506, %v504
    %v681 = vpack.c.b16 %v507, %v505
    %v682 = vpack.c.b16 %v510, %v508
    %v683 = vpack.c.b16 %v511, %v509
    %v684 = vpack.c.b16 %v514, %v512
    %v685 = vpack.c.b16 %v515, %v513
    %v686 = vpack.c.b16 %v518, %v516
    %v687 = vpack.c.b16 %v519, %v517
    %v688 = vpack.c.b16 %v522, %v520
    %v689 = vpack.c.b16 %v523, %v521
    %v690 = vpack.c.b16 %v526, %v524
    %v691 = vpack.c.b16 %v527, %v525
    %v692 = vpack.c.b16 %v530, %v528
    %v693 = vpack.c.b16 %v531, %v529
    %v694 = vpack.c.b16 %v534, %v532
    %v695 = vpack.c.b16 %v535, %v533
    %v696 = vpack.c.b16 %v538, %v536
    %v697 = vpack.c.b16 %v539, %v537
    %v698 = vpack.c.b16 %v542, %v540
    %v699 = vpack.c.b16 %v543, %v541
    %v700 = vpack.c.b16 %v546, %v544
    %v701 = vpack.c.b16 %v547, %v545
    %v702 = vpack.c.b16 %v550, %v548
    %v703 = vpack.c.b16 %v551, %v549
    %v704 = vpack.c.b16 %v554, %v552
    %v705 = vpack.c.b16 %v555, %v553
    %v706 = vpack.c.b16 %v558, %v556
    %v707 = vpack.c.b16 %v559, %v557
    %v708 = vpack.c.b16 %v562, %v560
    %v709 = vpack.c.b16 %v563, %v561
    %v710 = vpack.c.b16 %v566, %v564
    %v711 = vpack.c.b16 %v567, %v565
    %v712 = vpack.c.b16 %v570, %v568
    %v713 = vpack.c.b16 %v571, %v569
    %v714 = vpack.c.b16 %v574, %v572
    %v715 = vpack.c.b16 %v575, %v573
    %v716 = vpack.c.b16 %v578, %v576
    %v717 = vpack.c.b16 %v579, %v577
    %v718 = vpack.c.b16 %v582, %v580
    %v719 = vpack.c.b16 %v583, %v581
    %v720 = vpack.c.b16 %v586, %v584
    %v721 = vpack.c.b16 %v587, %v585
    %v722 = vpack.c.b16 %v590, %v588
    %v723 = vpack.c.b16 %v591, %v589
    %v724 = vpack.c.b16 %v594, %v592
    %v725 = vpack.c.b16 %v595, %v593
    %v726 = vpack.c.b16 %v598, %v596
    %v727 = vpack.c.b16 %v599, %v597
    %v728 = vpack.c.b16 %v602, %v600
    %v729 = vpack.c.b16 %v603, %v601
    %v730 = vpack.c.b16 %v606, %v604
    %v731 = vpack.c.b16 %v607, %v605
    %v732 = vpack.c.b16 %v610, %v608
    %v733 = vpack.c.b16 %v611, %v609
    %v734 = vpack.c.b16 %v614, %v612
    %v735 = vpack.c.b16 %v615, %v613
    %v736 = vpack.c.b16 %v618, %v616
    %v737 = vpack.c.b16 %v619, %v617
    %v738 = vpack.c.b16 %v622, %v620
    %v739 = vpack.c.b16 %v623, %v621
    %v740 = vpack.c.b16 %v626, %v624
    %v741 = vpack.c.b16 %v627, %v625
    %v742 = vpack.c.b16 %v630, %v628
    %v743 = vpack.c.b16 %v631, %v629
    %v744 = vpack.c.b16 %v634, %v632
    %v745 = vpack.c.b16 %v635, %v633
    %v746 = vpack.c.b16 %v638, %v636
    %v747 = vpack.c.b16 %v639, %v637
    %v748 = vpack.c.b16 %v642, %v640
    %v749 = vpack.c.b16 %v643, %v641
    %v750 = vpack.c.b16 %v646, %v644
    %v751 = vpack.c.b16 %v647, %v645
    %v752 = vpack.c.b16 %v650, %v648
    %v753 = vpack.c.b16 %v651, %v649
    %v754 = vpack.c.b16 %v654, %v652
    %v755 = vpack.c.b16 %v655, %v653
    %v756 = vpack.c.b16 %v658, %v656
    %v757 = vpack.c.b16 %v659, %v657
    %v758 = vpack.c.b16 %v662, %v660
    %v759 = vpack.c.b16 %v663, %v661
    %856 = vmatprep.subr.bf16.mxu0 %v665
    %857 = vmatpush1.bf16.msra.mxu0 %v664
    %858 = vmatprep.subr.bf16.mxu0 %v667
    %859 = vmatpush1.bf16.msra.mxu0 %v666
    %860 = vmatprep.subr.bf16.mxu0 %v669
    %861 = vmatpush1.bf16.msra.mxu0 %v668
    %862 = vmatprep.subr.bf16.mxu0 %v671
    %863 = vmatpush1.bf16.msra.mxu0 %v670
    %864 = vmatprep.subr.bf16.mxu0 %v673
    %865 = vmatpush1.bf16.msra.mxu0 %v672
    %866 = vmatprep.subr.bf16.mxu0 %v675
    %867 = vmatpush1.bf16.msra.mxu0 %v674
    %868 = vmatprep.subr.bf16.mxu0 %v677
    %869 = vmatpush1.bf16.msra.mxu0 %v676
    %870 = vmatprep.subr.bf16.mxu0 %v679
    %871 = vmatpush1.bf16.msra.mxu0 %v678
    %872 = vmatprep.subr.bf16.mxu0 %v681
    %873 = vmatpush1.bf16.msra.mxu0 %v680
    %874 = vmatprep.subr.bf16.mxu0 %v683
    %875 = vmatpush1.bf16.msra.mxu0 %v682
    %876 = vmatprep.subr.bf16.mxu0 %v685
    %877 = vmatpush1.bf16.msra.mxu0 %v684
    %878 = vmatprep.subr.bf16.mxu0 %v687
    %879 = vmatpush1.bf16.msra.mxu0 %v686
    %880 = vmatprep.subr.bf16.mxu0 %v689
    %881 = vmatpush1.bf16.msra.mxu0 %v688
    %882 = vmatprep.subr.bf16.mxu0 %v691
    %883 = vmatpush1.bf16.msra.mxu0 %v690
    %884 = vmatprep.subr.bf16.mxu0 %v693
    %885 = vmatpush1.bf16.msra.mxu0 %v692
    %886 = vmatprep.subr.bf16.mxu0 %v695
    %887 = vmatpush1.bf16.msra.mxu0 %v694
    %888 = vmatprep.mubr.bf16.mxu0 %v275
    %889 = vmatmul.mubr.bf16.gmra.mrb[0].mxu0 %v274
    %v890 = vpop.f32.mrb[0].mxu0
    %v891 = vadd.f32 0.0, %v890
    %v892 = vpop.f32.mrb[0].mxu0
    %v893 = vadd.f32 0.0, %v892
    %v894 = vpop.f32.mrb[0].mxu0
    %v895 = vpop.f32.mrb[0].mxu0
    %896 = vdwg.mxu0
    %897 = vmatprep.subr.bf16.mxu0 %v697
    %898 = vmatpush1.bf16.msra.mxu0 %v696
    %899 = vmatprep.subr.bf16.mxu0 %v699
    %900 = vmatpush1.bf16.msra.mxu0 %v698
    %901 = vmatprep.subr.bf16.mxu0 %v701
    %902 = vmatpush1.bf16.msra.mxu0 %v700
    %903 = vmatprep.subr.bf16.mxu0 %v703
    %904 = vmatpush1.bf16.msra.mxu0 %v702
    %905 = vmatprep.subr.bf16.mxu0 %v705
    %906 = vmatpush1.bf16.msra.mxu0 %v704
    %907 = vmatprep.subr.bf16.mxu0 %v707
    %908 = vmatpush1.bf16.msra.mxu0 %v706
    %909 = vmatprep.subr.bf16.mxu0 %v709
    %910 = vmatpush1.bf16.msra.mxu0 %v708
    %911 = vmatprep.subr.bf16.mxu0 %v711
    %912 = vmatpush1.bf16.msra.mxu0 %v710
    %913 = vmatprep.subr.bf16.mxu0 %v713
    %914 = vmatpush1.bf16.msra.mxu0 %v712
    %915 = vmatprep.subr.bf16.mxu0 %v715
    %916 = vmatpush1.bf16.msra.mxu0 %v714
    %917 = vmatprep.subr.bf16.mxu0 %v717
    %918 = vmatpush1.bf16.msra.mxu0 %v716
    %919 = vmatprep.subr.bf16.mxu0 %v719
    %920 = vmatpush1.bf16.msra.mxu0 %v718
    %921 = vmatprep.subr.bf16.mxu0 %v721
    %922 = vmatpush1.bf16.msra.mxu0 %v720
    %923 = vmatprep.subr.bf16.mxu0 %v723
    %924 = vmatpush1.bf16.msra.mxu0 %v722
    %925 = vmatprep.subr.bf16.mxu0 %v725
    %926 = vmatpush1.bf16.msra.mxu0 %v724
    %927 = vmatprep.subr.bf16.mxu0 %v727
    %928 = vmatpush1.bf16.msra.mxu0 %v726
    %929 = vmatprep.mubr.bf16.mxu0 %v277
    %930 = vmatmul.mubr.bf16.gmra.mrb[0].mxu0 %v276
    %v931 = vpop.f32.mrb[0].mxu0
    %v932 = vadd.f32 %v891, %v931
    %v933 = vpop.f32.mrb[0].mxu0
    %v934 = vadd.f32 %v893, %v933
    %v935 = vpop.f32.mrb[0].mxu0
    %v936 = vpop.f32.mrb[0].mxu0
    %937 = vdwg.mxu0
    %938 = vmatprep.subr.bf16.mxu0 %v729
    %939 = vmatpush1.bf16.msra.mxu0 %v728
    %940 = vmatprep.subr.bf16.mxu0 %v731
    %941 = vmatpush1.bf16.msra.mxu0 %v730
    %942 = vmatprep.subr.bf16.mxu0 %v733
    %943 = vmatpush1.bf16.msra.mxu0 %v732
    %944 = vmatprep.subr.bf16.mxu0 %v735
    %945 = vmatpush1.bf16.msra.mxu0 %v734
    %946 = vmatprep.subr.bf16.mxu0 %v737
    %947 = vmatpush1.bf16.msra.mxu0 %v736
    %948 = vmatprep.subr.bf16.mxu0 %v739
    %949 = vmatpush1.bf16.msra.mxu0 %v738
    %950 = vmatprep.subr.bf16.mxu0 %v741
    %951 = vmatpush1.bf16.msra.mxu0 %v740
    %952 = vmatprep.subr.bf16.mxu0 %v743
    %953 = vmatpush1.bf16.msra.mxu0 %v742
    %954 = vmatprep.subr.bf16.mxu0 %v745
    %955 = vmatpush1.bf16.msra.mxu0 %v744
    %956 = vmatprep.subr.bf16.mxu0 %v747
    %957 = vmatpush1.bf16.msra.mxu0 %v746
    %958 = vmatprep.subr.bf16.mxu0 %v749
    %959 = vmatpush1.bf16.msra.mxu0 %v748
    %960 = vmatprep.subr.bf16.mxu0 %v751
    %961 = vmatpush1.bf16.msra.mxu0 %v750
    %962 = vmatprep.subr.bf16.mxu0 %v753
    %963 = vmatpush1.bf16.msra.mxu0 %v752
    %964 = vmatprep.subr.bf16.mxu0 %v755
    %965 = vmatpush1.bf16.msra.mxu0 %v754
    %966 = vmatprep.subr.bf16.mxu0 %v757
    %967 = vmatpush1.bf16.msra.mxu0 %v756
    %968 = vmatprep.subr.bf16.mxu0 %v759
    %969 = vmatpush1.bf16.msra.mxu0 %v758
    %970 = vmatprep.mubr.bf16.mxu0 %v279
    %971 = vmatmul.mubr.bf16.gmra.mrb[0].mxu0 %v278
    %v972 = vpop.f32.mrb[0].mxu0
    %v973 = vadd.f32 %v932, %v972
    %v974 = vpop.f32.mrb[0].mxu0
    %v975 = vadd.f32 %v934, %v974
    %v976 = vpop.f32.mrb[0].mxu0
    %v977 = vpop.f32.mrb[0].mxu0
    %978 = vdwg.mxu0
    %v979 = vpack.c.bf16 %v973, %v973
    %v980 = vpack.c.bf16 %v975, %v975
    %v981 = vld [vmem:[%s4] sm:$0xf]
    %v982 = vld [vmem:[%s4 + $0x4] sm:$0xf]
    %v983 = vld [vmem:[%s4 + $0x8] sm:$0xf]
    %v984 = vld [vmem:[%s4 + $0xc] sm:$0xf]
    %v985 = vld [vmem:[%s4 + $0x10] sm:$0xf]
    %v986 = vld [vmem:[%s4 + $0x14] sm:$0xf]
    %v987 = vld [vmem:[%s4 + $0x18] sm:$0xf]
    %v988 = vld [vmem:[%s4 + $0x1c] sm:$0xf]
    %v989 = vld [vmem:[%s4 + $0x20] sm:$0xf]
    %v990 = vld [vmem:[%s4 + $0x24] sm:$0xf]
    %v991 = vld [vmem:[%s4 + $0x28] sm:$0xf]
    %v992 = vld [vmem:[%s4 + $0x2c] sm:$0xf]
    %v993 = vld [vmem:[%s4 + $0x30] sm:$0xf]
    %v994 = vld [vmem:[%s4 + $0x34] sm:$0xf]
    %v995 = vld [vmem:[%s4 + $0x38] sm:$0xf]
    %v996 = vld [vmem:[%s4 + $0x3c] sm:$0xf]
    %v997 = vld [vmem:[%s4 + $0x40] sm:$0xf]
    %v998 = vld [vmem:[%s4 + $0x44] sm:$0xf]
    %v999 = vld [vmem:[%s4 + $0x48] sm:$0xf]
    %v1000 = vld [vmem:[%s4 + $0x4c] sm:$0xf]
    %v1001 = vld [vmem:[%s4 + $0x50] sm:$0xf]
    %v1002 = vld [vmem:[%s4 + $0x54] sm:$0xf]
    %v1003 = vld [vmem:[%s4 + $0x58] sm:$0xf]
    %v1004 = vld [vmem:[%s4 + $0x5c] sm:$0xf]
    %v1005 = vld [vmem:[%s4 + $0x60] sm:$0xf]
    %v1006 = vld [vmem:[%s4 + $0x64] sm:$0xf]
    %v1007 = vld [vmem:[%s4 + $0x68] sm:$0xf]
    %v1008 = vld [vmem:[%s4 + $0x6c] sm:$0xf]
    %v1009 = vld [vmem:[%s4 + $0x70] sm:$0xf]
    %v1010 = vld [vmem:[%s4 + $0x74] sm:$0xf]
    %v1011 = vld [vmem:[%s4 + $0x78] sm:$0xf]
    %v1012 = vld [vmem:[%s4 + $0x7c] sm:$0xf]
    %v1013 = vld [vmem:[%s5] sm:$0x1]
    %v1015 = vlaneseq
    %v1016 = vshrl.u32 %v1015, 7
    %v1017 = vsub.s32 0, %v1016
    %v1018 = vrot.slane %v1013, %v1017
    %v1052 = vunpack.c.l.b16 %v981
    %v1053 = vunpack.c.l.b16 %v982
    %v1054 = vunpack.c.l.b16 %v983
    %v1055 = vunpack.c.l.b16 %v984
    %v1056 = vunpack.c.l.b16 %v985
    %v1057 = vunpack.c.l.b16 %v986
    %v1058 = vunpack.c.l.b16 %v987
    %v1059 = vunpack.c.l.b16 %v988
    %v1060 = vunpack.c.l.b16 %v989
    %v1061 = vunpack.c.l.b16 %v990
    %v1062 = vunpack.c.l.b16 %v991
    %v1063 = vunpack.c.l.b16 %v992
    %v1064 = vunpack.c.l.b16 %v993
    %v1065 = vunpack.c.l.b16 %v994
    %v1066 = vunpack.c.l.b16 %v995
    %v1067 = vunpack.c.l.b16 %v996
    %v1068 = vunpack.c.l.b16 %v997
    %v1069 = vunpack.c.l.b16 %v998
    %v1070 = vunpack.c.l.b16 %v999
    %v1071 = vunpack.c.l.b16 %v1000
    %v1072 = vunpack.c.l.b16 %v1001
    %v1073 = vunpack.c.l.b16 %v1002
    %v1074 = vunpack.c.l.b16 %v1003
    %v1075 = vunpack.c.l.b16 %v1004
    %v1076 = vunpack.c.l.b16 %v1005
    %v1077 = vunpack.c.l.b16 %v1006
    %v1078 = vunpack.c.l.b16 %v1007
    %v1079 = vunpack.c.l.b16 %v1008
    %v1080 = vunpack.c.l.b16 %v1009
    %v1081 = vunpack.c.l.b16 %v1010
    %v1082 = vunpack.c.l.b16 %v1011
    %v1083 = vunpack.c.l.b16 %v1012
    %v1084 = vpack.c.b16 %v1053, %v1052
    %v1085 = vpack.c.b16 %v1055, %v1054
    %v1086 = vpack.c.b16 %v1057, %v1056
    %v1087 = vpack.c.b16 %v1059, %v1058
    %v1088 = vpack.c.b16 %v1061, %v1060
    %v1089 = vpack.c.b16 %v1063, %v1062
    %v1090 = vpack.c.b16 %v1065, %v1064
    %v1091 = vpack.c.b16 %v1067, %v1066
    %v1092 = vpack.c.b16 %v1069, %v1068
    %v1093 = vpack.c.b16 %v1071, %v1070
    %v1094 = vpack.c.b16 %v1073, %v1072
    %v1095 = vpack.c.b16 %v1075, %v1074
    %v1096 = vpack.c.b16 %v1077, %v1076
    %v1097 = vpack.c.b16 %v1079, %v1078
    %v1098 = vpack.c.b16 %v1081, %v1080
    %v1099 = vpack.c.b16 %v1083, %v1082
    %1116 = vmatprep.subr.bf16.mxu0 0
    %1117 = vmatpush1.bf16.msra.mxu0 %v1084
    %1118 = vmatprep.subr.bf16.mxu0 0
    %1119 = vmatpush1.bf16.msra.mxu0 %v1085
    %1120 = vmatprep.subr.bf16.mxu0 0
    %1121 = vmatpush1.bf16.msra.mxu0 %v1086
    %1122 = vmatprep.subr.bf16.mxu0 0
    %1123 = vmatpush1.bf16.msra.mxu0 %v1087
    %1124 = vmatprep.subr.bf16.mxu0 0
    %1125 = vmatpush1.bf16.msra.mxu0 %v1088
    %1126 = vmatprep.subr.bf16.mxu0 0
    %1127 = vmatpush1.bf16.msra.mxu0 %v1089
    %1128 = vmatprep.subr.bf16.mxu0 0
    %1129 = vmatpush1.bf16.msra.mxu0 %v1090
    %1130 = vmatprep.subr.bf16.mxu0 0
    %1131 = vmatpush1.bf16.msra.mxu0 %v1091
    %1132 = vmatprep.subr.bf16.mxu0 0
    %1133 = vmatpush1.bf16.msra.mxu0 %v1092
    %1134 = vmatprep.subr.bf16.mxu0 0
    %1135 = vmatpush1.bf16.msra.mxu0 %v1093
    %1136 = vmatprep.subr.bf16.mxu0 0
    %1137 = vmatpush1.bf16.msra.mxu0 %v1094
    %1138 = vmatprep.subr.bf16.mxu0 0
    %1139 = vmatpush1.bf16.msra.mxu0 %v1095
    %1140 = vmatprep.subr.bf16.mxu0 0
    %1141 = vmatpush1.bf16.msra.mxu0 %v1096
    %1142 = vmatprep.subr.bf16.mxu0 0
    %1143 = vmatpush1.bf16.msra.mxu0 %v1097
    %1144 = vmatprep.subr.bf16.mxu0 0
    %1145 = vmatpush1.bf16.msra.mxu0 %v1098
    %1146 = vmatprep.subr.bf16.mxu0 0
    %1147 = vmatpush1.bf16.msra.mxu0 %v1099
    %1148 = vmatprep.mubr.bf16.mxu0 %v980
    %1149 = vmatmul.mubr.bf16.gmra.mrb[0].mxu0 %v979
    %v1150 = vpop.f32.mrb[0].mxu0
    %v1151 = vadd.f32 %v1018, %v1150
    %v1152 = vpop.f32.mrb[0].mxu0
    %v1153 = vpop.f32.mrb[0].mxu0
    %v1154 = vpop.f32.mrb[0].mxu0
    %1155 = vdwg.mxu0
    %v1156 = vmax.f32 %v1151, 0.0
    %v1157 = vpack.c.bf16 %v1156, %v1156
    %v1158 = vld [vmem:[%s6] sm:$0xf]
    %v1159 = vld [vmem:[%s6 + $0x4] sm:$0xf]
    %v1160 = vld [vmem:[%s6 + $0x8] sm:$0xf]
    %v1161 = vld [vmem:[%s6 + $0xc] sm:$0xf]
    %v1162 = vld [vmem:[%s7] sm:$0x1]
    %v1164 = vlaneseq
    %v1165 = vshrl.u32 %v1164, 7
    %v1166 = vsub.s32 0, %v1165
    %v1167 = vrot.slane %v1162, %v1166
    %v1173 = vunpack.c.l.b16 %v1158
    %v1174 = vunpack.c.l.b16 %v1159
    %v1175 = vunpack.c.l.b16 %v1160
    %v1176 = vunpack.c.l.b16 %v1161
    %v1177 = vpack.c.b16 %v1174, %v1173
    %v1178 = vpack.c.b16 %v1176, %v1175
    %v1182 = vsel %vm147, %v1157, 0
    %1184 = vmatprep.subr.bf16.mxu0 0
    %1185 = vmatpush1.bf16.msra.mxu0 %v1177
    %1186 = vmatprep.subr.bf16.mxu0 0
    %1187 = vmatpush1.bf16.msra.mxu0 %v1178
    %1188 = vmatprep.subr.bf16.mxu0 0
    %1189 = vmatpush1.bf16.msra.mxu0 0
    %1190 = vmatprep.subr.bf16.mxu0 0
    %1191 = vmatpush1.bf16.msra.mxu0 0
    %1192 = vmatprep.subr.bf16.mxu0 0
    %1193 = vmatpush1.bf16.msra.mxu0 0
    %1194 = vmatprep.subr.bf16.mxu0 0
    %1195 = vmatpush1.bf16.msra.mxu0 0
    %1196 = vmatprep.subr.bf16.mxu0 0
    %1197 = vmatpush1.bf16.msra.mxu0 0
    %1198 = vmatprep.subr.bf16.mxu0 0
    %1199 = vmatpush1.bf16.msra.mxu0 0
    %1200 = vmatprep.subr.bf16.mxu0 0
    %1201 = vmatpush1.bf16.msra.mxu0 0
    %1202 = vmatprep.subr.bf16.mxu0 0
    %1203 = vmatpush1.bf16.msra.mxu0 0
    %1204 = vmatprep.subr.bf16.mxu0 0
    %1205 = vmatpush1.bf16.msra.mxu0 0
    %1206 = vmatprep.subr.bf16.mxu0 0
    %1207 = vmatpush1.bf16.msra.mxu0 0
    %1208 = vmatprep.subr.bf16.mxu0 0
    %1209 = vmatpush1.bf16.msra.mxu0 0
    %1210 = vmatprep.subr.bf16.mxu0 0
    %1211 = vmatpush1.bf16.msra.mxu0 0
    %1212 = vmatprep.subr.bf16.mxu0 0
    %1213 = vmatpush1.bf16.msra.mxu0 0
    %1214 = vmatprep.subr.bf16.mxu0 0
    %1215 = vmatpush1.bf16.msra.mxu0 0
    %1216 = vmatprep.mubr.bf16.mxu0 0
    %1217 = vmatmul.mubr.bf16.gmra.mrb[0].mxu0 %v1182
    %v1218 = vpop.f32.mrb[0].mxu0
    %v1219 = vadd.f32 %v1167, %v1218
    %v1220 = vpop.f32.mrb[0].mxu0
    %v1221 = vpop.f32.mrb[0].mxu0
    %v1222 = vpop.f32.mrb[0].mxu0
    %1223 = vdwg.mxu0
    %v1224 = vmax.f32 %v1219, 0.0
    %v1225 = vpack.c.bf16 %v1224, %v1224
    %v1226 = vld [vmem:[%s8] sm:$0xf]
    %v1227 = vld [vmem:[%s8 + $0x4] sm:$0xf]
    %v1228 = vld [vmem:[%s9] sm:$0x1]
    %v1230 = vlaneseq
    %v1231 = vshrl.u32 %v1230, 7
    %v1232 = vsub.s32 0, %v1231
    %v1233 = vrot.slane %v1228, %v1232
    %v1237 = vunpack.c.l.b16 %v1226
    %v1238 = vunpack.c.l.b16 %v1227
    %v1239 = vpack.c.b16 %v1238, %v1237
    %vm1241 = vcmask 130048
    %v1243 = vsel %vm1241, %v1225, 0
    %1245 = vmatprep.subr.bf16.mxu0 0
    %1246 = vmatpush1.bf16.msra.mxu0 %v1239
    %1247 = vmatprep.subr.bf16.mxu0 0
    %1248 = vmatpush1.bf16.msra.mxu0 0
    %1249 = vmatprep.subr.bf16.mxu0 0
    %1250 = vmatpush1.bf16.msra.mxu0 0
    %1251 = vmatprep.subr.bf16.mxu0 0
    %1252 = vmatpush1.bf16.msra.mxu0 0
    %1253 = vmatprep.subr.bf16.mxu0 0
    %1254 = vmatpush1.bf16.msra.mxu0 0
    %1255 = vmatprep.subr.bf16.mxu0 0
    %1256 = vmatpush1.bf16.msra.mxu0 0
    %1257 = vmatprep.subr.bf16.mxu0 0
    %1258 = vmatpush1.bf16.msra.mxu0 0
    %1259 = vmatprep.subr.bf16.mxu0 0
    %1260 = vmatpush1.bf16.msra.mxu0 0
    %1261 = vmatprep.subr.bf16.mxu0 0
    %1262 = vmatpush1.bf16.msra.mxu0 0
    %1263 = vmatprep.subr.bf16.mxu0 0
    %1264 = vmatpush1.bf16.msra.mxu0 0
    %1265 = vmatprep.subr.bf16.mxu0 0
    %1266 = vmatpush1.bf16.msra.mxu0 0
    %1267 = vmatprep.subr.bf16.mxu0 0
    %1268 = vmatpush1.bf16.msra.mxu0 0
    %1269 = vmatprep.subr.bf16.mxu0 0
    %1270 = vmatpush1.bf16.msra.mxu0 0
    %1271 = vmatprep.subr.bf16.mxu0 0
    %1272 = vmatpush1.bf16.msra.mxu0 0
    %1273 = vmatprep.subr.bf16.mxu0 0
    %1274 = vmatpush1.bf16.msra.mxu0 0
    %1275 = vmatprep.subr.bf16.mxu0 0
    %1276 = vmatpush1.bf16.msra.mxu0 0
    %1277 = vmatprep.mubr.bf16.mxu0 0
    %1278 = vmatmul.mubr.bf16.gmra.mrb[0].mxu0 %v1243
    %v1279 = vpop.f32.mrb[0].mxu0
    %v1280 = vadd.f32 %v1233, %v1279
    %v1281 = vpop.f32.mrb[0].mxu0
    %v1282 = vpop.f32.mrb[0].mxu0
    %v1283 = vpop.f32.mrb[0].mxu0
    %1284 = vdwg.mxu0
    %1285 = vst [vmem:[#allocation5] sm:$0xff] %v1280
    // Predicated region
    $region46: #{tpu_custom_call.1} parent=1 // pred_check
      _
    $region47: #{tpu_custom_call.1} parent=1 // pred_check_branch
      %1287 = sbr.rel (0) target = $region49
    $region48: #{tpu_custom_call.1} parent=1 // pred_region
      %s1289 = ssub.s32 128, 128
      %1290 = vsyncadd [#allocation4], %s1289
      %s1292 = sshll.u32 [#allocation5], 4
      %s1293 = int_to_ptr.vmem [resolvable:$true] %s1292
      %1295 = dma.vmem_to_hbm [thread:$0]  %s1293, 128, %s10, [#allocation4]
    $region49: #{tpu_custom_call.1} parent=1 // pred_fallthru
      _
    // Predicated region
    $region50: #{tpu_custom_call.1} parent=1 // pred_check
      _
    $region51: #{tpu_custom_call.1} parent=1 // pred_check_branch
      %1297 = sbr.rel (0) target = $region53
    $region52: #{tpu_custom_call.1} parent=1 // pred_region
      %1298 = dma.done [#allocation4], 128
    $region53: #{tpu_custom_call.1} parent=1 // pred_fallthru
      _
    %1299 = vsyncpa [#allocation3], 1
    %1300 = vsyncpa [#allocation4], 1

</llo_original>
